<compile_context>
chip_gen: v6e
topology: v6e:2x2x1
jax: 0.10.0
libtpu: 0.0.40
codegen_flags: <defaults>
</compile_context>

<pallas_src>
import jax
import jax.numpy as jnp
from jax.experimental import pallas as pl
from jax.experimental.pallas import tpu as pltpu  # noqa: F401  (TPU backend)

BN_EPS = 1e-5


def _cause_specific_kernel(x_ref, w1_ref, bgb1_ref, w2_ref, bgb2_ref,
                           wo_ref, bo_ref, o_ref):
    """Single-step kernel: all risks evaluated at once via lane packing.

    x_ref   : (B, F)            shared input
    w1_ref  : (F, R*H1)         layer-1 weights, risks stacked on lanes
    bgb1_ref: (3, R*H1)         rows = [bias; gamma; beta] for layer 1
    w2_ref  : (R*H1, R*H2)      block-diagonal layer-2 weights
    bgb2_ref: (3, R*H2)         rows = [bias; gamma; beta] for layer 2
    wo_ref  : (R*H2, R*OUT)     block-diagonal output weights
    bo_ref  : (1, R*OUT)        output bias
    o_ref   : (B, R*OUT)        lane-dense output slab
    """
    x = x_ref[...]

    def dense_block(h, w_ref, bgb_ref):
        bgb = bgb_ref[...]
        b, g, be = bgb[0:1, :], bgb[1:2, :], bgb[2:3, :]
        # Linear
        h = jnp.dot(h, w_ref[...], preferred_element_type=jnp.float32) + b
        # ReLU
        h = jnp.maximum(h, 0.0)
        # BatchNorm1d, training-mode stats (batch mean, biased variance),
        # affine fused into one multiply-add.
        mean = jnp.mean(h, axis=0, keepdims=True)
        var = jnp.mean((h - mean) * (h - mean), axis=0, keepdims=True)
        scale = g * jax.lax.rsqrt(var + BN_EPS)
        shift = be - mean * scale
        return h * scale + shift

    h = dense_block(x, w1_ref, bgb1_ref)
    h = dense_block(h, w2_ref, bgb2_ref)
    # Final Linear (bias, no activation) -> single lane-dense store.
    o_ref[...] = jnp.dot(h, wo_ref[...], preferred_element_type=jnp.float32) + bo_ref[...]


def _pack_params(params):
    """Pack per-risk parameters into lane-stacked / block-diagonal form."""
    R, F, H1 = params["w1"].shape
    H2 = params["w2"].shape[2]
    OUT = params["wo"].shape[2]

    # Layer 1: shared input -> concatenate risks along the output-feature axis.
    w1p = jnp.transpose(params["w1"], (1, 0, 2)).reshape(F, R * H1)
    bgb1 = jnp.concatenate([params["b1"].reshape(1, R * H1),
                            params["g1"].reshape(1, R * H1),
                            params["be1"].reshape(1, R * H1)], axis=0)

    # Layer 2 / output: block-diagonal so risks stay independent.
    w2bd = jax.scipy.linalg.block_diag(*[params["w2"][r] for r in range(R)])
    bgb2 = jnp.concatenate([params["b2"].reshape(1, R * H2),
                            params["g2"].reshape(1, R * H2),
                            params["be2"].reshape(1, R * H2)], axis=0)

    wobd = jax.scipy.linalg.block_diag(*[params["wo"][r] for r in range(R)])
    bop = params["bo"].reshape(1, R * OUT)

    return w1p, bgb1, w2bd, bgb2, wobd, bop


def cause_specific_net(x, params):
    """x: [B, in_features] float32. Returns [B, num_risks, out_features]."""
    B, _ = x.shape
    R = params["w1"].shape[0]
    OUT = params["wo"].shape[2]

    w1p, bgb1, w2bd, bgb2, wobd, bop = _pack_params(params)

    # Single grid step; every operand fits in VMEM as a whole-array block
    # (default BlockSpecs -> one DMA per operand, no pipelining overhead).
    out_flat = pl.pallas_call(
        _cause_specific_kernel,
        out_shape=jax.ShapeDtypeStruct((B, R * OUT), jnp.float32),
    )(x, w1p, bgb1, w2bd, bgb2, wobd, bop)

    # Free row-major reshape -> matches torch.stack(out, dim=1).
    return out_flat.reshape(B, R, OUT)


def init_params(key, in_features, num_nodes_indiv, num_risks, out_features):
    """Deterministic synthetic parameters, stacked over the risk axis."""
    h1, h2 = num_nodes_indiv
    ks = jax.random.split(key, 6)

    def w(k, shape, fan_in):
        return (jax.random.normal(k, shape, jnp.float32) / jnp.sqrt(fan_in)).astype(jnp.float32)

    return {
        "w1": w(ks[0], (num_risks, in_features, h1), in_features),
        "b1": w(ks[1], (num_risks, 1, h1), in_features),
        "g1": jnp.ones((num_risks, 1, h1), jnp.float32),
        "be1": jnp.zeros((num_risks, 1, h1), jnp.float32),
        "w2": w(ks[2], (num_risks, h1, h2), h1),
        "b2": w(ks[3], (num_risks, 1, h2), h1),
        "g2": jnp.ones((num_risks, 1, h2), jnp.float32),
        "be2": jnp.zeros((num_risks, 1, h2), jnp.float32),
        "wo": w(ks[4], (num_risks, h2, out_features), h2),
        "bo": w(ks[5], (num_risks, 1, out_features), h2),
    }


def _reference(x, params):
    """Pure-JAX per-risk reference of the same forward pass."""
    def one_risk(r):
        h = x
        for wk, bk, gk, bek in (("w1", "b1", "g1", "be1"), ("w2", "b2", "g2", "be2")):
            h = h @ params[wk][r] + params[bk][r]
            h = jnp.maximum(h, 0.0)
            m = jnp.mean(h, axis=0, keepdims=True)
            v = jnp.mean((h - m) ** 2, axis=0, keepdims=True)
            h = (h - m) / jnp.sqrt(v + BN_EPS) * params[gk][r] + params[bek][r]
        return h @ params["wo"][r] + params["bo"][r]

    R = params["w1"].shape[0]
    return jnp.stack([one_risk(r) for r in range(R)], axis=1)


if __name__ == "__main__":
    in_features = 16
    num_nodes_indiv = (32, 32)
    num_risks = 3
    out_features = 8
    batch = 8

    key = jax.random.PRNGKey(0)
    kx, kp = jax.random.split(key)
    x = jax.random.normal(kx, (batch, in_features), jnp.float32)
    params = init_params(kp, in_features, num_nodes_indiv, num_risks, out_features)

    out = jax.jit(cause_specific_net)(x, params)
    out = jax.block_until_ready(out)
    assert out.shape == (batch, num_risks, out_features), out.shape

    ref = _reference(x, params)
    assert jnp.allclose(out, ref, atol=1e-4, rtol=1e-4), float(jnp.max(jnp.abs(out - ref)))

    print("KERNEL_OK")
</pallas_src>

<mosaic_0001>
module attributes {stable_mosaic.version = 11 : i64} {
  func.func @_cause_specific_kernel(%arg0: memref<8x16xf32, #tpu.memory_space<vmem>>, %arg1: memref<16x96xf32, #tpu.memory_space<vmem>>, %arg2: memref<3x96xf32, #tpu.memory_space<vmem>>, %arg3: memref<96x96xf32, #tpu.memory_space<vmem>>, %arg4: memref<3x96xf32, #tpu.memory_space<vmem>>, %arg5: memref<96x24xf32, #tpu.memory_space<vmem>>, %arg6: memref<1x24xf32, #tpu.memory_space<vmem>>, %arg7: memref<8x24xf32, #tpu.memory_space<vmem>>) attributes {dimension_semantics = [], scalar_prefetch = 0 : i64, scratch_operands = 0 : i64, tpu.core_type = #tpu.core_type<tc>} {
    %c0 = arith.constant 0 : index
    %c0_0 = arith.constant 0 : index
    %0 = vector.load %arg0[%c0, %c0_0] : memref<8x16xf32, #tpu.memory_space<vmem>>, vector<8x16xf32>
    %c0_1 = arith.constant 0 : index
    %c0_2 = arith.constant 0 : index
    %1 = vector.load %arg2[%c0_1, %c0_2] : memref<3x96xf32, #tpu.memory_space<vmem>>, vector<3x96xf32>
    %2 = vector.extract_strided_slice %1 {offsets = [0, 0], sizes = [1, 96], strides = [1, 1]} : vector<3x96xf32> to vector<1x96xf32>
    %3 = vector.extract_strided_slice %1 {offsets = [1, 0], sizes = [1, 96], strides = [1, 1]} : vector<3x96xf32> to vector<1x96xf32>
    %4 = vector.extract_strided_slice %1 {offsets = [2, 0], sizes = [1, 96], strides = [1, 1]} : vector<3x96xf32> to vector<1x96xf32>
    %c0_3 = arith.constant 0 : index
    %c0_4 = arith.constant 0 : index
    %5 = vector.load %arg1[%c0_3, %c0_4] : memref<16x96xf32, #tpu.memory_space<vmem>>, vector<16x96xf32>
    %cst = arith.constant dense<0.000000e+00> : vector<8x96xf32>
    %6 = tpu.matmul %0, %5, %cst {dimension_numbers = #tpu.dot_dimension_numbers<[1], [0], [0], [1], [0, 0, 1, 1], [], []>} : vector<8x16xf32>, vector<16x96xf32>, vector<8x96xf32> -> vector<8x96xf32>
    %7 = vector.broadcast %2 : vector<1x96xf32> to vector<8x96xf32>
    %8 = arith.addf %6, %7 : vector<8x96xf32>
    %cst_5 = arith.constant 0.000000e+00 : f32
    %9 = vector.broadcast %cst_5 : f32 to vector<8x96xf32>
    %10 = arith.maximumf %8, %9 : vector<8x96xf32>
    %cst_6 = arith.constant dense<0.000000e+00> : vector<96xf32>
    %11 = vector.multi_reduction <add>, %10, %cst_6 [0] : vector<8x96xf32> to vector<96xf32>
    %12 = vector.shape_cast %11 : vector<96xf32> to vector<1x96xf32>
    %cst_7 = arith.constant 8.000000e+00 : f32
    %13 = vector.broadcast %cst_7 : f32 to vector<1x96xf32>
    %14 = arith.divf %12, %13 : vector<1x96xf32>
    %15 = vector.broadcast %14 : vector<1x96xf32> to vector<8x96xf32>
    %16 = arith.subf %10, %15 : vector<8x96xf32>
    %17 = vector.broadcast %14 : vector<1x96xf32> to vector<8x96xf32>
    %18 = arith.subf %10, %17 : vector<8x96xf32>
    %19 = arith.mulf %16, %18 : vector<8x96xf32>
    %cst_8 = arith.constant dense<0.000000e+00> : vector<96xf32>
    %20 = vector.multi_reduction <add>, %19, %cst_8 [0] : vector<8x96xf32> to vector<96xf32>
    %21 = vector.shape_cast %20 : vector<96xf32> to vector<1x96xf32>
    %cst_9 = arith.constant 8.000000e+00 : f32
    %22 = vector.broadcast %cst_9 : f32 to vector<1x96xf32>
    %23 = arith.divf %21, %22 : vector<1x96xf32>
    %cst_10 = arith.constant 9.99999974E-6 : f32
    %24 = vector.broadcast %cst_10 : f32 to vector<1x96xf32>
    %25 = arith.addf %23, %24 : vector<1x96xf32>
    %26 = math.rsqrt %25 : vector<1x96xf32>
    %27 = arith.mulf %3, %26 : vector<1x96xf32>
    %28 = arith.mulf %14, %27 : vector<1x96xf32>
    %29 = arith.subf %4, %28 : vector<1x96xf32>
    %30 = vector.broadcast %27 : vector<1x96xf32> to vector<8x96xf32>
    %31 = arith.mulf %10, %30 : vector<8x96xf32>
    %32 = vector.broadcast %29 : vector<1x96xf32> to vector<8x96xf32>
    %33 = arith.addf %31, %32 : vector<8x96xf32>
    %c0_11 = arith.constant 0 : index
    %c0_12 = arith.constant 0 : index
    %34 = vector.load %arg4[%c0_11, %c0_12] : memref<3x96xf32, #tpu.memory_space<vmem>>, vector<3x96xf32>
    %35 = vector.extract_strided_slice %34 {offsets = [0, 0], sizes = [1, 96], strides = [1, 1]} : vector<3x96xf32> to vector<1x96xf32>
    %36 = vector.extract_strided_slice %34 {offsets = [1, 0], sizes = [1, 96], strides = [1, 1]} : vector<3x96xf32> to vector<1x96xf32>
    %37 = vector.extract_strided_slice %34 {offsets = [2, 0], sizes = [1, 96], strides = [1, 1]} : vector<3x96xf32> to vector<1x96xf32>
    %c0_13 = arith.constant 0 : index
    %c0_14 = arith.constant 0 : index
    %38 = vector.load %arg3[%c0_13, %c0_14] : memref<96x96xf32, #tpu.memory_space<vmem>>, vector<96x96xf32>
    %cst_15 = arith.constant dense<0.000000e+00> : vector<8x96xf32>
    %39 = tpu.matmul %33, %38, %cst_15 {dimension_numbers = #tpu.dot_dimension_numbers<[1], [0], [0], [1], [0, 0, 1, 1], [], []>} : vector<8x96xf32>, vector<96x96xf32>, vector<8x96xf32> -> vector<8x96xf32>
    %40 = vector.broadcast %35 : vector<1x96xf32> to vector<8x96xf32>
    %41 = arith.addf %39, %40 : vector<8x96xf32>
    %cst_16 = arith.constant 0.000000e+00 : f32
    %42 = vector.broadcast %cst_16 : f32 to vector<8x96xf32>
    %43 = arith.maximumf %41, %42 : vector<8x96xf32>
    %cst_17 = arith.constant dense<0.000000e+00> : vector<96xf32>
    %44 = vector.multi_reduction <add>, %43, %cst_17 [0] : vector<8x96xf32> to vector<96xf32>
    %45 = vector.shape_cast %44 : vector<96xf32> to vector<1x96xf32>
    %cst_18 = arith.constant 8.000000e+00 : f32
    %46 = vector.broadcast %cst_18 : f32 to vector<1x96xf32>
    %47 = arith.divf %45, %46 : vector<1x96xf32>
    %48 = vector.broadcast %47 : vector<1x96xf32> to vector<8x96xf32>
    %49 = arith.subf %43, %48 : vector<8x96xf32>
    %50 = vector.broadcast %47 : vector<1x96xf32> to vector<8x96xf32>
    %51 = arith.subf %43, %50 : vector<8x96xf32>
    %52 = arith.mulf %49, %51 : vector<8x96xf32>
    %cst_19 = arith.constant dense<0.000000e+00> : vector<96xf32>
    %53 = vector.multi_reduction <add>, %52, %cst_19 [0] : vector<8x96xf32> to vector<96xf32>
    %54 = vector.shape_cast %53 : vector<96xf32> to vector<1x96xf32>
    %cst_20 = arith.constant 8.000000e+00 : f32
    %55 = vector.broadcast %cst_20 : f32 to vector<1x96xf32>
    %56 = arith.divf %54, %55 : vector<1x96xf32>
    %cst_21 = arith.constant 9.99999974E-6 : f32
    %57 = vector.broadcast %cst_21 : f32 to vector<1x96xf32>
    %58 = arith.addf %56, %57 : vector<1x96xf32>
    %59 = math.rsqrt %58 : vector<1x96xf32>
    %60 = arith.mulf %36, %59 : vector<1x96xf32>
    %61 = arith.mulf %47, %60 : vector<1x96xf32>
    %62 = arith.subf %37, %61 : vector<1x96xf32>
    %63 = vector.broadcast %60 : vector<1x96xf32> to vector<8x96xf32>
    %64 = arith.mulf %43, %63 : vector<8x96xf32>
    %65 = vector.broadcast %62 : vector<1x96xf32> to vector<8x96xf32>
    %66 = arith.addf %64, %65 : vector<8x96xf32>
    %c0_22 = arith.constant 0 : index
    %c0_23 = arith.constant 0 : index
    %67 = vector.load %arg5[%c0_22, %c0_23] : memref<96x24xf32, #tpu.memory_space<vmem>>, vector<96x24xf32>
    %cst_24 = arith.constant dense<0.000000e+00> : vector<8x24xf32>
    %68 = tpu.matmul %66, %67, %cst_24 {dimension_numbers = #tpu.dot_dimension_numbers<[1], [0], [0], [1], [0, 0, 1, 1], [], []>} : vector<8x96xf32>, vector<96x24xf32>, vector<8x24xf32> -> vector<8x24xf32>
    %c0_25 = arith.constant 0 : index
    %c0_26 = arith.constant 0 : index
    %69 = vector.load %arg6[%c0_25, %c0_26] : memref<1x24xf32, #tpu.memory_space<vmem>>, vector<1x24xf32>
    %70 = vector.broadcast %69 : vector<1x24xf32> to vector<8x24xf32>
    %71 = arith.addf %68, %70 : vector<8x24xf32>
    %c0_27 = arith.constant 0 : index
    %c0_28 = arith.constant 0 : index
    %72 = vector.load %arg7[%c0_27, %c0_28] : memref<8x24xf32, #tpu.memory_space<vmem>>, vector<8x24xf32>
    tpu.vector_store %arg7[%c0_27, %c0_28], %71 {strides = array<i32>} : memref<8x24xf32, #tpu.memory_space<vmem>>, vector<8x24xf32>,
    return
  }
}

</mosaic_0001>

<llo_original>
// kernel: cause_specific_net.1
$region0: #{cause_specific_net.1}
  #allocation0 [shape = 'u32[]', space=smem, size = 0x4, offset = 0x4, fixed_abs, tag = 'smem constant byte address 0x4 - core index']
  #allocation1 [shape = 'u32[144,128]{1,0:T(1,128)}', space=vmem, size = 0x12000, scoped, tag = 'internal scratch']
  %s0 = inlined_call_operand.vmem [shape: f32[8,16], index: 0, kind: input, shape index: {}]
  %s1 = inlined_call_operand.vmem [shape: f32[16,96], index: 1, kind: input, shape index: {}]
  %s2 = inlined_call_operand.vmem [shape: f32[3,96], index: 2, kind: input, shape index: {}]
  %s3 = inlined_call_operand.vmem [shape: f32[96,96], index: 3, kind: input, shape index: {}]
  %s4 = inlined_call_operand.vmem [shape: f32[3,96], index: 4, kind: input, shape index: {}]
  %s5 = inlined_call_operand.vmem [shape: f32[96,24], index: 5, kind: input, shape index: {}]
  %s6 = inlined_call_operand.vmem [shape: f32[1,24], index: 6, kind: input, shape index: {}]
  %s7 = inlined_call_operand.vmem [shape: f32[8,24], index: 7, kind: output, shape index: {}]
  %s8 = sld [smem:[#allocation0]]
  $region38: #{cause_specific_net.1} parent=0
    _
  %s10 = ssub.s32 1, %s8
  %s11 = scalar_select 0, %s10, %s8
  // Predicated region
  $region2: #{cause_specific_net.1} parent=0 // pred_check
    _
  $region3: #{cause_specific_net.1} parent=0 // pred_check_branch
    %13 = sbr.rel (0) target = $region5
  $region4: #{cause_specific_net.1} parent=0 // pred_region
    _
  $region5: #{cause_specific_net.1} parent=0 // pred_fallthru
    _
  // Predicated region
  $region6: #{cause_specific_net.1} parent=0 // pred_check
    _
  $region7: #{cause_specific_net.1} parent=0 // pred_check_branch
    %15 = sbr.rel (0) target = $region9
  $region8: #{cause_specific_net.1} parent=0 // pred_region
    _
  $region9: #{cause_specific_net.1} parent=0 // pred_fallthru
    _
  // Predicated region
  $region10: #{cause_specific_net.1} parent=0 // pred_check
    _
  $region11: #{cause_specific_net.1} parent=0 // pred_check_branch
    %17 = sbr.rel (0) target = $region13
  $region12: #{cause_specific_net.1} parent=0 // pred_region
    _
  $region13: #{cause_specific_net.1} parent=0 // pred_fallthru
    _
  // Predicated region
  $region14: #{cause_specific_net.1} parent=0 // pred_check
    _
  $region15: #{cause_specific_net.1} parent=0 // pred_check_branch
    %19 = sbr.rel (0) target = $region17
  $region16: #{cause_specific_net.1} parent=0 // pred_region
    _
  $region17: #{cause_specific_net.1} parent=0 // pred_fallthru
    _
  // Predicated region
  $region18: #{cause_specific_net.1} parent=0 // pred_check
    _
  $region19: #{cause_specific_net.1} parent=0 // pred_check_branch
    %21 = sbr.rel (0) target = $region21
  $region20: #{cause_specific_net.1} parent=0 // pred_region
    _
  $region21: #{cause_specific_net.1} parent=0 // pred_fallthru
    _
  // Predicated region
  $region22: #{cause_specific_net.1} parent=0 // pred_check
    _
  $region23: #{cause_specific_net.1} parent=0 // pred_check_branch
    %23 = sbr.rel (0) target = $region25
  $region24: #{cause_specific_net.1} parent=0 // pred_region
    _
  $region25: #{cause_specific_net.1} parent=0 // pred_fallthru
    _
  // Predicated region
  $region26: #{cause_specific_net.1} parent=0 // pred_check
    _
  $region27: #{cause_specific_net.1} parent=0 // pred_check_branch
    %25 = sbr.rel (0) target = $region29
  $region28: #{cause_specific_net.1} parent=0 // pred_region
    _
  $region29: #{cause_specific_net.1} parent=0 // pred_fallthru
    _
  %v26 = vld [vmem:[%s0] sm:$0xff]
  %v27 = vld [vmem:[%s2] sm:$0x7]
  %v28 = vld [vmem:[%s1] sm:$0xff]
  %v29 = vld [vmem:[%s1 + $0x8] sm:$0xff]
  %v30 = vlaneseq
  %v31 = vshrl.u32 %v30, 7
  %v32 = vsub.s32 0, %v31
  %v33 = vrot.slane %v27, %v32
  %vm34 = vcmask 130048
  %v36 = vsel %vm34, %v26, 0
  %38 = vmatprep.subr.mxu0 0.0
  %39 = vmatpush1.msra.mxu0 0.0
  %40 = vmatprep.subr.mxu0 0.0
  %41 = vmatpush1.msra.mxu0 0.0
  %42 = vmatprep.subr.mxu0 0.0
  %43 = vmatpush1.msra.mxu0 0.0
  %44 = vmatprep.subr.mxu0 0.0
  %45 = vmatpush1.msra.mxu0 0.0
  %46 = vmatprep.subr.mxu0 0.0
  %47 = vmatpush1.msra.mxu0 0.0
  %48 = vmatprep.subr.mxu0 0.0
  %49 = vmatpush1.msra.mxu0 0.0
  %50 = vmatprep.subr.mxu0 0.0
  %51 = vmatpush1.msra.mxu0 0.0
  %52 = vmatprep.subr.mxu0 0.0
  %53 = vmatpush1.msra.mxu0 0.0
  %54 = vmatprep.subr.mxu0 0.0
  %55 = vmatpush1.msra.mxu0 0.0
  %56 = vmatprep.subr.mxu0 0.0
  %57 = vmatpush1.msra.mxu0 0.0
  %58 = vmatprep.subr.mxu0 0.0
  %59 = vmatpush1.msra.mxu0 0.0
  %60 = vmatprep.subr.mxu0 0.0
  %61 = vmatpush1.msra.mxu0 0.0
  %62 = vmatprep.subr.mxu0 0.0
  %63 = vmatpush1.msra.mxu0 0.0
  %64 = vmatprep.subr.mxu0 0.0
  %65 = vmatpush1.msra.mxu0 0.0
  %66 = vmatprep.subr.mxu0 0.0
  %67 = vmatpush1.msra.mxu0 %v29
  %68 = vmatprep.subr.mxu0 0.0
  %69 = vmatpush1.msra.mxu0 %v28
  %70 = vmatprep.subr.mxu0 0.0
  %71 = vmatpush2.msra.mxu0 0.0
  %72 = vmatprep.subr.mxu0 0.0
  %73 = vmatpush2.msra.mxu0 0.0
  %74 = vmatprep.subr.mxu0 0.0
  %75 = vmatpush2.msra.mxu0 0.0
  %76 = vmatprep.subr.mxu0 0.0
  %77 = vmatpush2.msra.mxu0 0.0
  %78 = vmatprep.subr.mxu0 0.0
  %79 = vmatpush2.msra.mxu0 0.0
  %80 = vmatprep.subr.mxu0 0.0
  %81 = vmatpush2.msra.mxu0 0.0
  %82 = vmatprep.subr.mxu0 0.0
  %83 = vmatpush2.msra.mxu0 0.0
  %84 = vmatprep.subr.mxu0 0.0
  %85 = vmatpush2.msra.mxu0 0.0
  %86 = vmatprep.subr.mxu0 0.0
  %87 = vmatpush2.msra.mxu0 0.0
  %88 = vmatprep.subr.mxu0 0.0
  %89 = vmatpush2.msra.mxu0 0.0
  %90 = vmatprep.subr.mxu0 0.0
  %91 = vmatpush2.msra.mxu0 0.0
  %92 = vmatprep.subr.mxu0 0.0
  %93 = vmatpush2.msra.mxu0 0.0
  %94 = vmatprep.subr.mxu0 0.0
  %95 = vmatpush2.msra.mxu0 0.0
  %96 = vmatprep.subr.mxu0 0.0
  %97 = vmatpush2.msra.mxu0 0.0
  %98 = vmatprep.subr.mxu0 0.0
  %99 = vmatpush2.msra.mxu0 0.0
  %100 = vmatprep.subr.mxu0 0.0
  %101 = vmatpush2.msra.mxu0 0.0
  %102 = vmatprep.mubr.f32.mxu0 0.0
  %103 = vmatmul.mubr.f32.gmra.mxu0 %v36
  %v104 = vpop.f32.mrf.mxu0
  %v105 = vadd.f32 %v33, %v104
  %v106 = vpop.f32.mrf.mxu0
  %107 = vdwg.mxu0
  %v108 = vmax.f32 %v105, 0.0
  %vm109 = vcmask 785408
  %v110 = vsel %vm109, %v108, 0.0
  %v111 = vrot.slane %v110, 4
  %v112 = vadd.f32 %v110, %v111
  %v113 = vrot.slane %v112, 2
  %v114 = vadd.f32 %v112, %v113
  %v115 = vrot.slane %v114, 1
  %v116 = vadd.f32 %v114, %v115
  %v117 = vrcp.pop 8.0
  %v118 = vmul.f32 %v116, %v117
  %v119 = vsub.f32 %v108, %v118
  %v120 = vmul.f32 %v119, %v119
  %v121 = vsel %vm109, %v120, 0.0
  %v122 = vrot.slane %v121, 4
  %v123 = vadd.f32 %v121, %v122
  %v124 = vrot.slane %v123, 2
  %v125 = vadd.f32 %v123, %v124
  %v126 = vrot.slane %v125, 1
  %v127 = vadd.f32 %v125, %v126
  %v128 = vmul.f32 %v127, %v117
  %v129 = vadd.f32 %v128, 1e-05
  %v130 = vrsqrt.pop %v129
  %v131 = vmul.f32 %v27, %v130
  %v132 = vmul.f32 %v118, %v131
  %v134 = vrot.slane %v132, 7
  %v136 = vsub.f32 %v27, %v134
  %v137 = vlaneseq
  %v138 = vshrl.u32 %v137, 7
  %v139 = vsub.s32 1, %v138
  %v140 = vrot.slane %v131, %v139
  %v141 = vmul.f32 %v108, %v140
  %v142 = vlaneseq
  %v143 = vshrl.u32 %v142, 7
  %v144 = vsub.s32 2, %v143
  %v145 = vrot.slane %v136, %v144
  %v146 = vadd.f32 %v141, %v145
  %v147 = vld [vmem:[%s4] sm:$0x7]
  %v148 = vld [vmem:[%s3] sm:$0xff]
  %v149 = vld [vmem:[%s3 + $0x8] sm:$0xff]
  %v150 = vld [vmem:[%s3 + $0x10] sm:$0xff]
  %v151 = vld [vmem:[%s3 + $0x18] sm:$0xff]
  %v152 = vld [vmem:[%s3 + $0x20] sm:$0xff]
  %v153 = vld [vmem:[%s3 + $0x28] sm:$0xff]
  %v154 = vld [vmem:[%s3 + $0x30] sm:$0xff]
  %v155 = vld [vmem:[%s3 + $0x38] sm:$0xff]
  %v156 = vld [vmem:[%s3 + $0x40] sm:$0xff]
  %v157 = vld [vmem:[%s3 + $0x48] sm:$0xff]
  %v158 = vld [vmem:[%s3 + $0x50] sm:$0xff]
  %v159 = vld [vmem:[%s3 + $0x58] sm:$0xff]
  %v160 = vlaneseq
  %v161 = vshrl.u32 %v160, 7
  %v162 = vsub.s32 0, %v161
  %v163 = vrot.slane %v147, %v162
  %v165 = vsel %vm109, %v146, 0
  %167 = vmatprep.subr.mxu0 0.0
  %168 = vmatpush1.msra.mxu0 0.0
  %169 = vmatprep.subr.mxu0 0.0
  %170 = vmatpush1.msra.mxu0 0.0
  %171 = vmatprep.subr.mxu0 0.0
  %172 = vmatpush1.msra.mxu0 0.0
  %173 = vmatprep.subr.mxu0 0.0
  %174 = vmatpush1.msra.mxu0 0.0
  %175 = vmatprep.subr.mxu0 0.0
  %176 = vmatpush1.msra.mxu0 %v159
  %177 = vmatprep.subr.mxu0 0.0
  %178 = vmatpush1.msra.mxu0 %v158
  %179 = vmatprep.subr.mxu0 0.0
  %180 = vmatpush1.msra.mxu0 %v157
  %181 = vmatprep.subr.mxu0 0.0
  %182 = vmatpush1.msra.mxu0 %v156
  %183 = vmatprep.subr.mxu0 0.0
  %184 = vmatpush1.msra.mxu0 %v155
  %185 = vmatprep.subr.mxu0 0.0
  %186 = vmatpush1.msra.mxu0 %v154
  %187 = vmatprep.subr.mxu0 0.0
  %188 = vmatpush1.msra.mxu0 %v153
  %189 = vmatprep.subr.mxu0 0.0
  %190 = vmatpush1.msra.mxu0 %v152
  %191 = vmatprep.subr.mxu0 0.0
  %192 = vmatpush1.msra.mxu0 %v151
  %193 = vmatprep.subr.mxu0 0.0
  %194 = vmatpush1.msra.mxu0 %v150
  %195 = vmatprep.subr.mxu0 0.0
  %196 = vmatpush1.msra.mxu0 %v149
  %197 = vmatprep.subr.mxu0 0.0
  %198 = vmatpush1.msra.mxu0 %v148
  %199 = vmatprep.subr.mxu0 0.0
  %200 = vmatpush2.msra.mxu0 0.0
  %201 = vmatprep.subr.mxu0 0.0
  %202 = vmatpush2.msra.mxu0 0.0
  %203 = vmatprep.subr.mxu0 0.0
  %204 = vmatpush2.msra.mxu0 0.0
  %205 = vmatprep.subr.mxu0 0.0
  %206 = vmatpush2.msra.mxu0 0.0
  %207 = vmatprep.subr.mxu0 0.0
  %208 = vmatpush2.msra.mxu0 0.0
  %209 = vmatprep.subr.mxu0 0.0
  %210 = vmatpush2.msra.mxu0 0.0
  %211 = vmatprep.subr.mxu0 0.0
  %212 = vmatpush2.msra.mxu0 0.0
  %213 = vmatprep.subr.mxu0 0.0
  %214 = vmatpush2.msra.mxu0 0.0
  %215 = vmatprep.subr.mxu0 0.0
  %216 = vmatpush2.msra.mxu0 0.0
  %217 = vmatprep.subr.mxu0 0.0
  %218 = vmatpush2.msra.mxu0 0.0
  %219 = vmatprep.subr.mxu0 0.0
  %220 = vmatpush2.msra.mxu0 0.0
  %221 = vmatprep.subr.mxu0 0.0
  %222 = vmatpush2.msra.mxu0 0.0
  %223 = vmatprep.subr.mxu0 0.0
  %224 = vmatpush2.msra.mxu0 0.0
  %225 = vmatprep.subr.mxu0 0.0
  %226 = vmatpush2.msra.mxu0 0.0
  %227 = vmatprep.subr.mxu0 0.0
  %228 = vmatpush2.msra.mxu0 0.0
  %229 = vmatprep.subr.mxu0 0.0
  %230 = vmatpush2.msra.mxu0 0.0
  %231 = vmatprep.mubr.f32.mxu0 0.0
  %232 = vmatmul.mubr.f32.gmra.mxu0 %v165
  %v233 = vpop.f32.mrf.mxu0
  %v234 = vadd.f32 %v163, %v233
  %v235 = vpop.f32.mrf.mxu0
  %236 = vdwg.mxu0
  %v237 = vmax.f32 %v234, 0.0
  %v238 = vsel %vm109, %v237, 0.0
  %v239 = vrot.slane %v238, 4
  %v240 = vadd.f32 %v238, %v239
  %v241 = vrot.slane %v240, 2
  %v242 = vadd.f32 %v240, %v241
  %v243 = vrot.slane %v242, 1
  %v244 = vadd.f32 %v242, %v243
  %v245 = vmul.f32 %v244, %v117
  %v246 = vsub.f32 %v237, %v245
  %v247 = vmul.f32 %v246, %v246
  %v248 = vsel %vm109, %v247, 0.0
  %v249 = vrot.slane %v248, 4
  %v250 = vadd.f32 %v248, %v249
  %v251 = vrot.slane %v250, 2
  %v252 = vadd.f32 %v250, %v251
  %v253 = vrot.slane %v252, 1
  %v254 = vadd.f32 %v252, %v253
  %v255 = vmul.f32 %v254, %v117
  %v256 = vadd.f32 %v255, 1e-05
  %v257 = vrsqrt.pop %v256
  %v258 = vmul.f32 %v147, %v257
  %v259 = vmul.f32 %v245, %v258
  %v261 = vrot.slane %v259, 7
  %v263 = vsub.f32 %v147, %v261
  %v264 = vlaneseq
  %v265 = vshrl.u32 %v264, 7
  %v266 = vsub.s32 1, %v265
  %v267 = vrot.slane %v258, %v266
  %v268 = vmul.f32 %v237, %v267
  %v269 = vlaneseq
  %v270 = vshrl.u32 %v269, 7
  %v271 = vsub.s32 2, %v270
  %v272 = vrot.slane %v263, %v271
  %v273 = vadd.f32 %v268, %v272
  %v274 = vld [vmem:[%s5] sm:$0xff]
  %v275 = vld [vmem:[%s5 + $0x8] sm:$0xff]
  %v276 = vld [vmem:[%s5 + $0x10] sm:$0xff]
  %v277 = vld [vmem:[%s5 + $0x18] sm:$0xff]
  %v278 = vld [vmem:[%s5 + $0x20] sm:$0xff]
  %v279 = vld [vmem:[%s5 + $0x28] sm:$0xff]
  %v280 = vld [vmem:[%s5 + $0x30] sm:$0xff]
  %v281 = vld [vmem:[%s5 + $0x38] sm:$0xff]
  %v282 = vld [vmem:[%s5 + $0x40] sm:$0xff]
  %v283 = vld [vmem:[%s5 + $0x48] sm:$0xff]
  %v284 = vld [vmem:[%s5 + $0x50] sm:$0xff]
  %v285 = vld [vmem:[%s5 + $0x58] sm:$0xff]
  %v286 = vld [vmem:[%s6] sm:$0x1]
  %v288 = vlaneseq
  %v289 = vshrl.u32 %v288, 7
  %v290 = vsub.s32 0, %v289
  %v291 = vrot.slane %v286, %v290
  %v294 = vsel %vm109, %v273, 0
  %296 = vmatprep.subr.mxu0 0.0
  %297 = vmatpush1.msra.mxu0 0.0
  %298 = vmatprep.subr.mxu0 0.0
  %299 = vmatpush1.msra.mxu0 0.0
  %300 = vmatprep.subr.mxu0 0.0
  %301 = vmatpush1.msra.mxu0 0.0
  %302 = vmatprep.subr.mxu0 0.0
  %303 = vmatpush1.msra.mxu0 0.0
  %304 = vmatprep.subr.mxu0 0.0
  %305 = vmatpush1.msra.mxu0 %v285
  %306 = vmatprep.subr.mxu0 0.0
  %307 = vmatpush1.msra.mxu0 %v284
  %308 = vmatprep.subr.mxu0 0.0
  %309 = vmatpush1.msra.mxu0 %v283
  %310 = vmatprep.subr.mxu0 0.0
  %311 = vmatpush1.msra.mxu0 %v282
  %312 = vmatprep.subr.mxu0 0.0
  %313 = vmatpush1.msra.mxu0 %v281
  %314 = vmatprep.subr.mxu0 0.0
  %315 = vmatpush1.msra.mxu0 %v280
  %316 = vmatprep.subr.mxu0 0.0
  %317 = vmatpush1.msra.mxu0 %v279
  %318 = vmatprep.subr.mxu0 0.0
  %319 = vmatpush1.msra.mxu0 %v278
  %320 = vmatprep.subr.mxu0 0.0
  %321 = vmatpush1.msra.mxu0 %v277
  %322 = vmatprep.subr.mxu0 0.0
  %323 = vmatpush1.msra.mxu0 %v276
  %324 = vmatprep.subr.mxu0 0.0
  %325 = vmatpush1.msra.mxu0 %v275
  %326 = vmatprep.subr.mxu0 0.0
  %327 = vmatpush1.msra.mxu0 %v274
  %328 = vmatprep.subr.mxu0 0.0
  %329 = vmatpush2.msra.mxu0 0.0
  %330 = vmatprep.subr.mxu0 0.0
  %331 = vmatpush2.msra.mxu0 0.0
  %332 = vmatprep.subr.mxu0 0.0
  %333 = vmatpush2.msra.mxu0 0.0
  %334 = vmatprep.subr.mxu0 0.0
  %335 = vmatpush2.msra.mxu0 0.0
  %336 = vmatprep.subr.mxu0 0.0
  %337 = vmatpush2.msra.mxu0 0.0
  %338 = vmatprep.subr.mxu0 0.0
  %339 = vmatpush2.msra.mxu0 0.0
  %340 = vmatprep.subr.mxu0 0.0
  %341 = vmatpush2.msra.mxu0 0.0
  %342 = vmatprep.subr.mxu0 0.0
  %343 = vmatpush2.msra.mxu0 0.0
  %344 = vmatprep.subr.mxu0 0.0
  %345 = vmatpush2.msra.mxu0 0.0
  %346 = vmatprep.subr.mxu0 0.0
  %347 = vmatpush2.msra.mxu0 0.0
  %348 = vmatprep.subr.mxu0 0.0
  %349 = vmatpush2.msra.mxu0 0.0
  %350 = vmatprep.subr.mxu0 0.0
  %351 = vmatpush2.msra.mxu0 0.0
  %352 = vmatprep.subr.mxu0 0.0
  %353 = vmatpush2.msra.mxu0 0.0
  %354 = vmatprep.subr.mxu0 0.0
  %355 = vmatpush2.msra.mxu0 0.0
  %356 = vmatprep.subr.mxu0 0.0
  %357 = vmatpush2.msra.mxu0 0.0
  %358 = vmatprep.subr.mxu0 0.0
  %359 = vmatpush2.msra.mxu0 0.0
  %360 = vmatprep.mubr.f32.mxu0 0.0
  %361 = vmatmul.mubr.f32.gmra.mxu0 %v294
  %v362 = vpop.f32.mrf.mxu0
  %v363 = vadd.f32 %v291, %v362
  %v364 = vpop.f32.mrf.mxu0
  %365 = vdwg.mxu0
  %vm366 = vcmask 195584
  %367 = vst.msk [vmem:[%s7] sm:$0xff] %vm366, %v363
  // Predicated region
  $region30: #{cause_specific_net.1} parent=0 // pred_check
    _
  $region31: #{cause_specific_net.1} parent=0 // pred_check_branch
    %369 = sbr.rel (0) target = $region33
  $region32: #{cause_specific_net.1} parent=0 // pred_region
    _
  $region33: #{cause_specific_net.1} parent=0 // pred_fallthru
    _
  // Predicated region
  $region34: #{cause_specific_net.1} parent=0 // pred_check
    _
  $region35: #{cause_specific_net.1} parent=0 // pred_check_branch
    %371 = sbr.rel (0) target = $region37
  $region36: #{cause_specific_net.1} parent=0 // pred_region
    _
  $region37: #{cause_specific_net.1} parent=0 // pred_fallthru
    _

</llo_original>
